<compile_context>
chip_gen: v7x
topology: tpu7x:2x2x1
jax: 0.10.0
libtpu: 0.0.40
codegen_flags: <defaults>
</compile_context>

<pallas_src>
import functools

import jax
import jax.numpy as jnp
from jax.experimental import pallas as pl
from jax.experimental.pallas import tpu as pltpu


_TILE_B_MAX = 4096  # keep <= 4K for v7x's 64 MiB VMEM; 8192 is fine on v5e/v6e


def _round_up(x, m):
    return ((x + m - 1) // m) * m


def make_kernel(d_in, d_h, d_out):
    """Build the fused kernel with static offsets into the packed param slab.

    Packed slab rows (all row offsets are multiples of 8 -> sublane aligned):
      [0      : d_in   ]  W_in  (d_in, d_h)
      [d_in   : +d_h   ]  W_a = [w_h1 | w_cv]          (d_h, d_h + d_out)
      [...    : +d_h   ]  W_h2 (d_h, d_h)
      [...    : +d_h   ]  W_b = [w_cv | w_out]         (d_h, 2*d_out)
      last 4 rows       :  b_in, b_a, b_h2, b_b (zero padded to d_h + d_out)
    """
    r_in0, r_in1 = 0, d_in
    r_a0, r_a1 = r_in1, r_in1 + d_h
    r_h0, r_h1 = r_a1, r_a1 + d_h
    r_b0, r_b1 = r_h1, r_h1 + d_h
    rb_in, rb_a, rb_h, rb_b = r_b1, r_b1 + 1, r_b1 + 2, r_b1 + 3
    na = d_h + d_out          # fused output width for the `input` consumers
    nb = 2 * d_out            # fused output width for the `hidden` consumers

    def kernel(x_ref, p_ref, out_ref):
        x = x_ref[...]                                              # (TB, d_in)

        # input = input_layer(x)
        inp = (jnp.dot(x, p_ref[r_in0:r_in1, :d_h],
                       preferred_element_type=jnp.float32)
               + p_ref[rb_in:rb_in + 1, :d_h])                      # (TB, d_h)

        # Fused: [hidden_layer[0] | convert_layer] applied to `input`
        ya = (jnp.dot(inp, p_ref[r_a0:r_a1, :na],
                      preferred_element_type=jnp.float32)
              + p_ref[rb_a:rb_a + 1, :na])                          # (TB, d_h+d_out)
        h = jnp.tanh(ya[:, :d_h])                                   # hidden_layer[1]
        input_pred = ya[:, d_h:na]                                  # convert_layer(input)

        # hidden_layer[2] -> Tanh
        h = jnp.tanh(jnp.dot(h, p_ref[r_h0:r_h1, :d_h],
                             preferred_element_type=jnp.float32)
                     + p_ref[rb_h:rb_h + 1, :d_h])                  # (TB, d_h)

        # Fused: [convert_layer | output_layer] applied to `hidden`
        yb = (jnp.dot(h, p_ref[r_b0:r_b1, :nb],
                      preferred_element_type=jnp.float32)
              + p_ref[rb_b:rb_b + 1, :nb])                          # (TB, 2*d_out)

        # Single lane-contiguous output slab: [input_pred | hidden_pred | output]
        out_ref[...] = jnp.concatenate([input_pred, yb], axis=1)    # (TB, 3*d_out)

    return kernel


def pack_params(p, layers):
    """Pack the 5 (in,out) weights and 5 biases into one row-stacked slab."""
    d_in, d_h, d_out = layers[0], layers[1], layers[-1]
    na = d_h + d_out

    w_a = jnp.concatenate([p["w_h1"], p["w_cv"]], axis=1)           # (d_h, na)
    b_a = jnp.concatenate([p["b_h1"], p["b_cv"]], axis=0)           # (na,)
    w_b = jnp.concatenate([p["w_cv"], p["w_out"]], axis=1)          # (d_h, 2*d_out)
    b_b = jnp.concatenate([p["b_cv"], p["b_out"]], axis=0)          # (2*d_out,)

    def pad_cols(m):
        return jnp.pad(m, ((0, 0), (0, na - m.shape[1])))

    rows = [
        pad_cols(p["w_in"]),                 # rows [0, d_in)
        w_a,                                 # rows [d_in, d_in+d_h)
        pad_cols(p["w_h2"]),                 # rows [.., +d_h)
        pad_cols(w_b),                       # rows [.., +d_h)
        pad_cols(p["b_in"][None, :]),        # bias rows
        b_a[None, :],
        pad_cols(p["b_h2"][None, :]),
        pad_cols(b_b[None, :]),
    ]
    return jnp.concatenate(rows, axis=0).astype(jnp.float32)        # (d_in+3*d_h+4, na)


@functools.partial(jax.jit, static_argnames=("layers", "tile_b", "compute_dtype"))
def network_forward(x, slab, layers, tile_b=None, compute_dtype=None):
    """Pallas forward: returns (input_pred, hidden_pred, output)."""
    d_in, d_h, d_out = layers[0], layers[1], layers[-1]
    B = x.shape[0]

    if tile_b is None:
        tile_b = min(_TILE_B_MAX, _round_up(B, 8))
    tile_b = max(8, _round_up(tile_b, 8))
    b_pad = _round_up(B, tile_b)
    if b_pad != B:
        x = jnp.pad(x, ((0, b_pad - B), (0, 0)))

    # Optional bf16 matmul operands (recommended on v6e/v7x; accumulation,
    # bias add and tanh stay in f32 inside the kernel, which also keeps v5e's
    # VPU/EUP happy).
    if compute_dtype is not None:
        x = x.astype(compute_dtype)
        slab = slab.astype(compute_dtype)

    kernel = make_kernel(d_in, d_h, d_out)
    grid = (b_pad // tile_b,)

    out = pl.pallas_call(
        kernel,
        out_shape=jax.ShapeDtypeStruct((b_pad, 3 * d_out), jnp.float32),
        grid=grid,
        in_specs=[
            pl.BlockSpec((tile_b, d_in), lambda i: (i, 0)),
            pl.BlockSpec(slab.shape, lambda i: (0, 0)),     # pinned param slab
        ],
        out_specs=pl.BlockSpec((tile_b, 3 * d_out), lambda i: (i, 0)),
        compiler_params=pltpu.CompilerParams(
            dimension_semantics=("parallel",)),
    )(x, slab)

    return (out[:B, 0:d_out],
            out[:B, d_out:2 * d_out],
            out[:B, 2 * d_out:3 * d_out])


# ----------------------------------------------------------------------------
# Parameter init (mimics torch.nn.Linear default init) + pure-JAX reference.
# ----------------------------------------------------------------------------
def init_linear(key, fan_in, fan_out):
    kw, kb = jax.random.split(key)
    bound = 1.0 / jnp.sqrt(jnp.float32(fan_in))
    w = jax.random.uniform(kw, (fan_in, fan_out), jnp.float32, -bound, bound)
    b = jax.random.uniform(kb, (fan_out,), jnp.float32, -bound, bound)
    return w, b


def init_params(key, layers):
    assert len(layers) == 6, "this instantiation implements a 6-entry `layers` list"
    keys = jax.random.split(key, 5)
    p = {}
    p["w_in"], p["b_in"] = init_linear(keys[0], layers[0], layers[1])    # input_layer
    p["w_cv"], p["b_cv"] = init_linear(keys[1], layers[1], layers[-1])   # convert_layer
    p["w_h1"], p["b_h1"] = init_linear(keys[2], layers[2], layers[3])    # hidden_layer[0]
    p["w_h2"], p["b_h2"] = init_linear(keys[3], layers[3], layers[4])    # hidden_layer[2]
    p["w_out"], p["b_out"] = init_linear(keys[4], layers[-2], layers[-1])  # output_layer
    return p


def ref_forward(x, p):
    """Pure-JAX reference of the PyTorch forward."""
    inp = x @ p["w_in"] + p["b_in"]
    input_pred = inp @ p["w_cv"] + p["b_cv"]
    h = jnp.tanh(inp @ p["w_h1"] + p["b_h1"])
    h = jnp.tanh(h @ p["w_h2"] + p["b_h2"])
    hidden_pred = h @ p["w_cv"] + p["b_cv"]
    output = h @ p["w_out"] + p["b_out"]
    return input_pred, hidden_pred, output


if __name__ == "__main__":
    layers = (16, 32, 32, 32, 32, 8)
    batch = 20          # deliberately not a multiple of the tile -> exercises padding

    root = jax.random.PRNGKey(0)
    kx, kp = jax.random.split(root)
    x = jax.random.normal(kx, (batch, layers[0]), jnp.float32)
    params = init_params(kp, layers)
    slab = pack_params(params, layers)

    # Small tile here to exercise the batch grid (3 tiles of 8 rows, last padded).
    out_pallas = network_forward(x, slab, layers, tile_b=8)
    out_pallas = jax.block_until_ready(out_pallas)

    out_ref = ref_forward(x, params)
    for got, want in zip(out_pallas, out_ref):
        assert got.shape == want.shape and got.dtype == want.dtype
        assert jnp.allclose(got, want, atol=1e-5, rtol=1e-5)

    print("KERNEL_OK")
</pallas_src>

<mosaic_0001>
module attributes {stable_mosaic.version = 11 : i64} {
  func.func @kernel(%arg0: i32, %arg1: memref<8x16xf32, #tpu.memory_space<vmem>>, %arg2: memref<116x40xf32, #tpu.memory_space<vmem>>, %arg3: memref<8x24xf32, #tpu.memory_space<vmem>>) attributes {dimension_semantics = [#tpu.dimension_semantics<parallel>], iteration_bounds = array<i64: 3>, scalar_prefetch = 0 : i64, scratch_operands = 0 : i64, tpu.core_type = #tpu.core_type<tc>, window_params = [{transform_indices = @transform_0, window_bounds = array<i64: 8, 16>}, {pipeline_mode = #tpu.pipeline_mode<synchronous>, transform_indices = @transform_1, window_bounds = array<i64: 116, 40>}, {transform_indices = @transform_2, window_bounds = array<i64: 8, 24>}]} {
    %c0 = arith.constant 0 : index
    %c0_0 = arith.constant 0 : index
    %0 = vector.load %arg1[%c0, %c0_0] : memref<8x16xf32, #tpu.memory_space<vmem>>, vector<8x16xf32>
    %c0_1 = arith.constant 0 : index
    %c0_2 = arith.constant 0 : index
    %1 = vector.load %arg2[%c0_1, %c0_2] : memref<116x40xf32, #tpu.memory_space<vmem>>, vector<16x32xf32>
    %cst = arith.constant dense<0.000000e+00> : vector<8x32xf32>
    %2 = tpu.matmul %0, %1, %cst {dimension_numbers = #tpu.dot_dimension_numbers<[1], [0], [0], [1], [0, 0, 1, 1], [], []>} : vector<8x16xf32>, vector<16x32xf32>, vector<8x32xf32> -> vector<8x32xf32>
    %c112 = arith.constant 112 : index
    %c0_3 = arith.constant 0 : index
    %3 = vector.load %arg2[%c112, %c0_3] : memref<116x40xf32, #tpu.memory_space<vmem>>, vector<1x32xf32>
    %4 = vector.broadcast %3 : vector<1x32xf32> to vector<8x32xf32>
    %5 = arith.addf %2, %4 : vector<8x32xf32>
    %c16 = arith.constant 16 : index
    %c0_4 = arith.constant 0 : index
    %6 = vector.load %arg2[%c16, %c0_4] : memref<116x40xf32, #tpu.memory_space<vmem>>, vector<32x40xf32>
    %cst_5 = arith.constant dense<0.000000e+00> : vector<8x40xf32>
    %7 = tpu.matmul %5, %6, %cst_5 {dimension_numbers = #tpu.dot_dimension_numbers<[1], [0], [0], [1], [0, 0, 1, 1], [], []>} : vector<8x32xf32>, vector<32x40xf32>, vector<8x40xf32> -> vector<8x40xf32>
    %c113 = arith.constant 113 : index
    %c0_6 = arith.constant 0 : index
    %8 = vector.load %arg2[%c113, %c0_6] : memref<116x40xf32, #tpu.memory_space<vmem>>, vector<1x40xf32>
    %9 = vector.broadcast %8 : vector<1x40xf32> to vector<8x40xf32>
    %10 = arith.addf %7, %9 : vector<8x40xf32>
    %11 = vector.extract_strided_slice %10 {offsets = [0, 0], sizes = [8, 32], strides = [1, 1]} : vector<8x40xf32> to vector<8x32xf32>
    %12 = math.tanh %11 : vector<8x32xf32>
    %13 = vector.extract_strided_slice %10 {offsets = [0, 32], sizes = [8, 8], strides = [1, 1]} : vector<8x40xf32> to vector<8x8xf32>
    %c48 = arith.constant 48 : index
    %c0_7 = arith.constant 0 : index
    %14 = vector.load %arg2[%c48, %c0_7] : memref<116x40xf32, #tpu.memory_space<vmem>>, vector<32x32xf32>
    %cst_8 = arith.constant dense<0.000000e+00> : vector<8x32xf32>
    %15 = tpu.matmul %12, %14, %cst_8 {dimension_numbers = #tpu.dot_dimension_numbers<[1], [0], [0], [1], [0, 0, 1, 1], [], []>} : vector<8x32xf32>, vector<32x32xf32>, vector<8x32xf32> -> vector<8x32xf32>
    %c114 = arith.constant 114 : index
    %c0_9 = arith.constant 0 : index
    %16 = vector.load %arg2[%c114, %c0_9] : memref<116x40xf32, #tpu.memory_space<vmem>>, vector<1x32xf32>
    %17 = vector.broadcast %16 : vector<1x32xf32> to vector<8x32xf32>
    %18 = arith.addf %15, %17 : vector<8x32xf32>
    %19 = math.tanh %18 : vector<8x32xf32>
    %c80 = arith.constant 80 : index
    %c0_10 = arith.constant 0 : index
    %20 = vector.load %arg2[%c80, %c0_10] : memref<116x40xf32, #tpu.memory_space<vmem>>, vector<32x16xf32>
    %cst_11 = arith.constant dense<0.000000e+00> : vector<8x16xf32>
    %21 = tpu.matmul %19, %20, %cst_11 {dimension_numbers = #tpu.dot_dimension_numbers<[1], [0], [0], [1], [0, 0, 1, 1], [], []>} : vector<8x32xf32>, vector<32x16xf32>, vector<8x16xf32> -> vector<8x16xf32>
    %c115 = arith.constant 115 : index
    %c0_12 = arith.constant 0 : index
    %22 = vector.load %arg2[%c115, %c0_12] : memref<116x40xf32, #tpu.memory_space<vmem>>, vector<1x16xf32>
    %23 = vector.broadcast %22 : vector<1x16xf32> to vector<8x16xf32>
    %24 = arith.addf %21, %23 : vector<8x16xf32>
    %25 = tpu.concatenate %13, %24 in 1 : vector<8x8xf32>, vector<8x16xf32> -> vector<8x24xf32>
    %c0_13 = arith.constant 0 : index
    %c0_14 = arith.constant 0 : index
    %26 = vector.load %arg3[%c0_13, %c0_14] : memref<8x24xf32, #tpu.memory_space<vmem>>, vector<8x24xf32>
    tpu.vector_store %arg3[%c0_13, %c0_14], %25 {strides = array<i32>} : memref<8x24xf32, #tpu.memory_space<vmem>>, vector<8x24xf32>,
    return
  }
  func.func @transform_0(%arg0: i32) -> (i32, i32) {
    %c0_i32 = arith.constant 0 : i32
    %c0_i32_0 = arith.constant 0 : i32
    return %arg0, %c0_i32 : i32, i32
  }
  func.func @transform_1(%arg0: i32) -> (i32, i32) {
    %c0_i32 = arith.constant 0 : i32
    %c0_i32_0 = arith.constant 0 : i32
    %c0_i32_1 = arith.constant 0 : i32
    return %c0_i32, %c0_i32_0 : i32, i32
  }
  func.func @transform_2(%arg0: i32) -> (i32, i32) {
    %c0_i32 = arith.constant 0 : i32
    %c0_i32_0 = arith.constant 0 : i32
    return %arg0, %c0_i32 : i32, i32
  }
}

</mosaic_0001>

<llo_original>
// kernel: network_forward.1
$region0: #{network_forward.1}
  #allocation0 [shape = 'u32[]', space=smem, size = 0x4, offset = 0x4, fixed_abs, tag = 'smem constant byte address 0x4 - core index']
  #allocation1 [shape = 'u32[144,128]{1,0:T(1,128)}', space=vmem, size = 0x12000, scoped, tag = 'internal scratch']
  %s0 = inlined_call_operand.vmem [shape: f32[24,16], index: 0, kind: input, shape index: {}]
  %s1 = inlined_call_operand.vmem [shape: f32[116,40], index: 1, kind: input, shape index: {}]
  %s2 = inlined_call_operand.vmem [shape: f32[24,24], index: 2, kind: output, shape index: {}]
  %s3 = sld [smem:[#allocation0]]
  $region41: #{network_forward.1} parent=0
    _
  %s5 = ssub.s32 1, %s3
  %s6 = scalar_select 0, %s5, %s3
  loop: start=0, step=1, limit=5
  $region2: #{network_forward.1} parent=0 // loop_pre_header
    _
  $region3: #{network_forward.1} parent=0 // loop_header
    %s8 = sphi 0, %s12
    %p9 = scmp.ge.s32.totalorder %s8, 5
    %s18 = sphi 0, %s20
    %s21 = sphi 0, %s18
    %s22 = sphi 0, %s21
    %s38 = sphi 0, %s22
    %s42 = sphi 0, %s42
    %s44 = sphi 0, %s42
    %s45 = sphi 0, %s44
    %s59 = sphi 0, %s45
    %s65 = sphi 0, %s67
    %s68 = sphi 0, %s65
    %s69 = sphi 0, %s68
    %s85 = sphi 0, %s69
  $region4: #{network_forward.1} parent=0 // loop_header_branch
    %11 = sbr.rel (%p9) target = $region8
  $region5: #{network_forward.1} parent=0 // loop_body
    %s13 = ssub.s32 %s8, 1
    %s14 = ssub.s32 %s8, 2
    %s15 = sadd.s32 %s8, 1
    %s16 = ssub.s32 %s8, %s15
    %p17 = scmp.eq.s32.totalorder %s16, 0
    %s19 = sadd.s32 %s18, 1
    %s20 = scalar_select %p17, %s18, %s19
    %p23 = pneg %p17
    %p24 = scmp.eq.s32.totalorder %s8, 2
    %p25 = por %p23, %p24
    %p26 = scmp.ne.s32.totalorder %s18, %s21
    %p27 = scmp.eq.s32.totalorder %s8, 0
    %p28 = por %p26, %p27
    %p29 = scmp.ne.s32.totalorder %s18, %s21
    %p30 = scmp.eq.s32.totalorder %s13, 2
    %p31 = por %p29, %p30
    %p32 = scmp.ne.s32.totalorder %s21, %s22
    %p33 = scmp.eq.s32.totalorder %s13, 0
    %p34 = por %p32, %p33
    %p35 = scmp.ne.s32.totalorder %s21, %s22
    %p36 = scmp.eq.s32.totalorder %s14, 2
    %p37 = por %p35, %p36
    %p39 = scmp.ne.s32.totalorder %s22, %s38
    %p40 = scmp.eq.s32.totalorder %s14, 0
    %p41 = por %p39, %p40
    %s43 = sadd.s32 %s42, 1
    %p46 = scmp.eq.s32.totalorder %s8, 2
    %p47 = scmp.ne.s32.totalorder %s42, %s44
    %p48 = scmp.eq.s32.totalorder %s8, 0
    %p49 = por %p47, %p48
    %p50 = scmp.ne.s32.totalorder %s42, %s44
    %p51 = scmp.eq.s32.totalorder %s13, 2
    %p52 = por %p50, %p51
    %p53 = scmp.ne.s32.totalorder %s44, %s45
    %p54 = scmp.eq.s32.totalorder %s13, 0
    %p55 = por %p53, %p54
    %p56 = scmp.ne.s32.totalorder %s44, %s45
    %p57 = scmp.eq.s32.totalorder %s14, 2
    %p58 = por %p56, %p57
    %p60 = scmp.ne.s32.totalorder %s45, %s59
    %p61 = scmp.eq.s32.totalorder %s14, 0
    %p62 = por %p60, %p61
    %s63 = ssub.s32 %s8, %s15
    %p64 = scmp.eq.s32.totalorder %s63, 0
    %s66 = sadd.s32 %s65, 1
    %s67 = scalar_select %p64, %s65, %s66
    %p70 = pneg %p64
    %p71 = scmp.eq.s32.totalorder %s8, 2
    %p72 = por %p70, %p71
    %p73 = scmp.ne.s32.totalorder %s65, %s68
    %p74 = scmp.eq.s32.totalorder %s8, 0
    %p75 = por %p73, %p74
    %p76 = scmp.ne.s32.totalorder %s65, %s68
    %p77 = scmp.eq.s32.totalorder %s13, 2
    %p78 = por %p76, %p77
    %p79 = scmp.ne.s32.totalorder %s68, %s69
    %p80 = scmp.eq.s32.totalorder %s13, 0
    %p81 = por %p79, %p80
    %p82 = scmp.ne.s32.totalorder %s68, %s69
    %p83 = scmp.eq.s32.totalorder %s14, 2
    %p84 = por %p82, %p83
    %p86 = scmp.ne.s32.totalorder %s69, %s85
    %p87 = scmp.eq.s32.totalorder %s14, 0
    %p88 = por %p86, %p87
    %p89 = scmp.le.s32.totalorder 1, %s8
    %p90 = scmp.lt.s32.totalorder %s8, 4
    %p91 = pnand %p89, %p90
    %p92 = pneg %p91
    // Predicated region
    $region9: #{network_forward.1} parent=5 // pred_check
      _
    $region10: #{network_forward.1} parent=5 // pred_check_branch
      %94 = sbr.rel (%p91) target = $region12
    $region11: #{network_forward.1} parent=5 // pred_region
      %s95 = ssub.s32 %s8, 1
      // Predicated region
      $region13: #{network_forward.1} parent=11 // pred_check
        %p96 = pneg %p55
      $region14: #{network_forward.1} parent=11 // pred_check_branch
        %98 = sbr.rel (%p96) target = $region16
      $region15: #{network_forward.1} parent=11 // pred_region
        _
      $region16: #{network_forward.1} parent=11 // pred_fallthru
        _
    $region12: #{network_forward.1} parent=5 // pred_fallthru
      _
    %p99 = scmp.lt.s32.totalorder %s8, 3
    // Predicated region
    $region17: #{network_forward.1} parent=5 // pred_check
      %p100 = pneg %p99
    $region18: #{network_forward.1} parent=5 // pred_check_branch
      %102 = sbr.rel (%p100) target = $region20
    $region19: #{network_forward.1} parent=5 // pred_region
      // Predicated region
      $region21: #{network_forward.1} parent=19 // pred_check
        %p103 = pneg %p28
      $region22: #{network_forward.1} parent=19 // pred_check_branch
        %105 = sbr.rel (%p103) target = $region24
      $region23: #{network_forward.1} parent=19 // pred_region
        %p106 = scmp.lt.s32.totalorder %s8, 2
        %s107 = scalar_select %p106, %s8, 2
        %s108 = smul.addr %s107, 8
        %s109 = scalar_lea.vmem %s0, %s108
      $region24: #{network_forward.1} parent=19 // pred_fallthru
        _
    $region20: #{network_forward.1} parent=5 // pred_fallthru
      _
    %p110 = scmp.le.s32.totalorder 1, %s8
    %p111 = scmp.lt.s32.totalorder %s8, 4
    %p112 = pnand %p110, %p111
    %p113 = pneg %p112
    // Predicated region
    $region25: #{network_forward.1} parent=5 // pred_check
      _
    $region26: #{network_forward.1} parent=5 // pred_check_branch
      %115 = sbr.rel (%p112) target = $region28
    $region27: #{network_forward.1} parent=5 // pred_region
      %s116 = ssub.s32 %s8, 1
      %p117 = scmp.lt.s32.totalorder %s13, 2
      %s118 = scalar_select %p117, %s13, 2
      %s119 = smul.addr %s118, 8
      %s120 = scalar_lea.vmem %s0, %s119
      %p121 = pneg %p34
      %p122 = pneg %p31
      %p123 = pneg %p55
      %p124 = pneg %p52
      %p125 = pneg %p81
      %p126 = pneg %p78
      %p127 = scmp.lt.s32.totalorder %s13, 2
      %s128 = scalar_select %p127, %s13, 2
      %s129 = smul.addr %s128, 8
      %s130 = scalar_lea.vmem %s2, %s129
      %p131 = scmp.lt.s32.totalorder %s13, 2
      %s132 = scalar_select %p131, %s13, 2
      %s133 = smul.addr %s132, 8
      %s134 = scalar_lea.vmem %s0, %s133
      %p135 = scmp.lt.s32.totalorder %s13, 2
      %s136 = scalar_select %p135, %s13, 2
      %s137 = smul.addr %s136, 8
      %s138 = scalar_lea.vmem %s2, %s137
      %v139 = vld [vmem:[%s134] sm:$0xff]
      %v140 = vld [vmem:[%s1] sm:$0xff]
      %v141 = vld [vmem:[%s1 + $0x8] sm:$0xff]
      %v142 = vld [vmem:[%s1 + $0x70] sm:$0x1]
      %v143 = vlaneseq
      %v144 = vshrl.u32 %v143, 7
      %v145 = vsub.s32 0, %v144
      %v146 = vrot.slane %v142, %v145
      %vm147 = vcmask 130048
      %v149 = vsel %vm147, %v139, 0
      %151 = vmatprep.subr.mxu0 0.0
      %152 = vmatpush1.msra.mxu0 %v140
      %153 = vmatprep.subr.mxu0 0.0
      %154 = vmatpush1.msra.mxu0 %v141
      %155 = vmatprep.subr.mxu0 0.0
      %156 = vmatpush1.msra.mxu0 0.0
      %157 = vmatprep.subr.mxu0 0.0
      %158 = vmatpush1.msra.mxu0 0.0
      %159 = vmatprep.subr.mxu0 0.0
      %160 = vmatpush1.msra.mxu0 0.0
      %161 = vmatprep.subr.mxu0 0.0
      %162 = vmatpush1.msra.mxu0 0.0
      %163 = vmatprep.subr.mxu0 0.0
      %164 = vmatpush1.msra.mxu0 0.0
      %165 = vmatprep.subr.mxu0 0.0
      %166 = vmatpush1.msra.mxu0 0.0
      %167 = vmatprep.subr.mxu0 0.0
      %168 = vmatpush1.msra.mxu0 0.0
      %169 = vmatprep.subr.mxu0 0.0
      %170 = vmatpush1.msra.mxu0 0.0
      %171 = vmatprep.subr.mxu0 0.0
      %172 = vmatpush1.msra.mxu0 0.0
      %173 = vmatprep.subr.mxu0 0.0
      %174 = vmatpush1.msra.mxu0 0.0
      %175 = vmatprep.subr.mxu0 0.0
      %176 = vmatpush1.msra.mxu0 0.0
      %177 = vmatprep.subr.mxu0 0.0
      %178 = vmatpush1.msra.mxu0 0.0
      %179 = vmatprep.subr.mxu0 0.0
      %180 = vmatpush1.msra.mxu0 0.0
      %181 = vmatprep.subr.mxu0 0.0
      %182 = vmatpush1.msra.mxu0 0.0
      %183 = vmatprep.subr.mxu0 0.0
      %184 = vmatpush1.msra.mxu0 0.0
      %185 = vmatprep.subr.mxu0 0.0
      %186 = vmatpush1.msra.mxu0 0.0
      %187 = vmatprep.subr.mxu0 0.0
      %188 = vmatpush1.msra.mxu0 0.0
      %189 = vmatprep.subr.mxu0 0.0
      %190 = vmatpush1.msra.mxu0 0.0
      %191 = vmatprep.subr.mxu0 0.0
      %192 = vmatpush1.msra.mxu0 0.0
      %193 = vmatprep.subr.mxu0 0.0
      %194 = vmatpush1.msra.mxu0 0.0
      %195 = vmatprep.subr.mxu0 0.0
      %196 = vmatpush1.msra.mxu0 0.0
      %197 = vmatprep.subr.mxu0 0.0
      %198 = vmatpush1.msra.mxu0 0.0
      %199 = vmatprep.subr.mxu0 0.0
      %200 = vmatpush1.msra.mxu0 0.0
      %201 = vmatprep.subr.mxu0 0.0
      %202 = vmatpush1.msra.mxu0 0.0
      %203 = vmatprep.subr.mxu0 0.0
      %204 = vmatpush1.msra.mxu0 0.0
      %205 = vmatprep.subr.mxu0 0.0
      %206 = vmatpush1.msra.mxu0 0.0
      %207 = vmatprep.subr.mxu0 0.0
      %208 = vmatpush1.msra.mxu0 0.0
      %209 = vmatprep.subr.mxu0 0.0
      %210 = vmatpush1.msra.mxu0 0.0
      %211 = vmatprep.subr.mxu0 0.0
      %212 = vmatpush1.msra.mxu0 0.0
      %213 = vmatprep.subr.mxu0 0.0
      %214 = vmatpush1.msra.mxu0 0.0
      %215 = vmatprep.mubr.f32.mxu0 0.0
      %216 = vmatmul.mubr.f32.gmra.mrb[0].mxu0 %v149
      %v217 = vpop.f32.mrb[0].mxu0
      %v218 = vadd.f32 %v146, %v217
      %v219 = vpop.f32.mrb[0].mxu0
      %220 = vdwg.mxu0
      %v221 = vld [vmem:[%s1 + $0x10] sm:$0xff]
      %v222 = vld [vmem:[%s1 + $0x18] sm:$0xff]
      %v223 = vld [vmem:[%s1 + $0x20] sm:$0xff]
      %v224 = vld [vmem:[%s1 + $0x28] sm:$0xff]
      %v225 = vld [vmem:[%s1 + $0x71] sm:$0x1]
      %v226 = vlaneseq
      %v227 = vshrl.u32 %v226, 7
      %v228 = vsub.s32 0, %v227
      %v229 = vrot.slane %v225, %v228
      %vm230 = vcmask 261120
      %v232 = vsel %vm230, %v218, 0
      %234 = vmatprep.subr.mxu0 0.0
      %235 = vmatpush1.msra.mxu0 %v221
      %236 = vmatprep.subr.mxu0 0.0
      %237 = vmatpush1.msra.mxu0 %v222
      %238 = vmatprep.subr.mxu0 0.0
      %239 = vmatpush1.msra.mxu0 %v223
      %240 = vmatprep.subr.mxu0 0.0
      %241 = vmatpush1.msra.mxu0 %v224
      %242 = vmatprep.subr.mxu0 0.0
      %243 = vmatpush1.msra.mxu0 0.0
      %244 = vmatprep.subr.mxu0 0.0
      %245 = vmatpush1.msra.mxu0 0.0
      %246 = vmatprep.subr.mxu0 0.0
      %247 = vmatpush1.msra.mxu0 0.0
      %248 = vmatprep.subr.mxu0 0.0
      %249 = vmatpush1.msra.mxu0 0.0
      %250 = vmatprep.subr.mxu0 0.0
      %251 = vmatpush1.msra.mxu0 0.0
      %252 = vmatprep.subr.mxu0 0.0
      %253 = vmatpush1.msra.mxu0 0.0
      %254 = vmatprep.subr.mxu0 0.0
      %255 = vmatpush1.msra.mxu0 0.0
      %256 = vmatprep.subr.mxu0 0.0
      %257 = vmatpush1.msra.mxu0 0.0
      %258 = vmatprep.subr.mxu0 0.0
      %259 = vmatpush1.msra.mxu0 0.0
      %260 = vmatprep.subr.mxu0 0.0
      %261 = vmatpush1.msra.mxu0 0.0
      %262 = vmatprep.subr.mxu0 0.0
      %263 = vmatpush1.msra.mxu0 0.0
      %264 = vmatprep.subr.mxu0 0.0
      %265 = vmatpush1.msra.mxu0 0.0
      %266 = vmatprep.subr.mxu0 0.0
      %267 = vmatpush1.msra.mxu0 0.0
      %268 = vmatprep.subr.mxu0 0.0
      %269 = vmatpush1.msra.mxu0 0.0
      %270 = vmatprep.subr.mxu0 0.0
      %271 = vmatpush1.msra.mxu0 0.0
      %272 = vmatprep.subr.mxu0 0.0
      %273 = vmatpush1.msra.mxu0 0.0
      %274 = vmatprep.subr.mxu0 0.0
      %275 = vmatpush1.msra.mxu0 0.0
      %276 = vmatprep.subr.mxu0 0.0
      %277 = vmatpush1.msra.mxu0 0.0
      %278 = vmatprep.subr.mxu0 0.0
      %279 = vmatpush1.msra.mxu0 0.0
      %280 = vmatprep.subr.mxu0 0.0
      %281 = vmatpush1.msra.mxu0 0.0
      %282 = vmatprep.subr.mxu0 0.0
      %283 = vmatpush1.msra.mxu0 0.0
      %284 = vmatprep.subr.mxu0 0.0
      %285 = vmatpush1.msra.mxu0 0.0
      %286 = vmatprep.subr.mxu0 0.0
      %287 = vmatpush1.msra.mxu0 0.0
      %288 = vmatprep.subr.mxu0 0.0
      %289 = vmatpush1.msra.mxu0 0.0
      %290 = vmatprep.subr.mxu0 0.0
      %291 = vmatpush1.msra.mxu0 0.0
      %292 = vmatprep.subr.mxu0 0.0
      %293 = vmatpush1.msra.mxu0 0.0
      %294 = vmatprep.subr.mxu0 0.0
      %295 = vmatpush1.msra.mxu0 0.0
      %296 = vmatprep.subr.mxu0 0.0
      %297 = vmatpush1.msra.mxu0 0.0
      %298 = vmatprep.mubr.f32.mxu0 0.0
      %299 = vmatmul.mubr.f32.gmra.mrb[0].mxu0 %v232
      %v300 = vpop.f32.mrb[0].mxu0
      %v301 = vadd.f32 %v229, %v300
      %v302 = vpop.f32.mrb[0].mxu0
      %303 = vdwg.mxu0
      %v304 = vtanh.pop %v301
      %v305 = vld [vmem:[%s1 + $0x30] sm:$0xff]
      %v306 = vld [vmem:[%s1 + $0x38] sm:$0xff]
      %v307 = vld [vmem:[%s1 + $0x40] sm:$0xff]
      %v308 = vld [vmem:[%s1 + $0x48] sm:$0xff]
      %v309 = vld [vmem:[%s1 + $0x72] sm:$0x1]
      %v310 = vlaneseq
      %v311 = vshrl.u32 %v310, 7
      %v312 = vsub.s32 0, %v311
      %v313 = vrot.slane %v309, %v312
      %v315 = vsel %vm230, %v304, 0
      %317 = vmatprep.subr.mxu0 0.0
      %318 = vmatpush1.msra.mxu0 %v305
      %319 = vmatprep.subr.mxu0 0.0
      %320 = vmatpush1.msra.mxu0 %v306
      %321 = vmatprep.subr.mxu0 0.0
      %322 = vmatpush1.msra.mxu0 %v307
      %323 = vmatprep.subr.mxu0 0.0
      %324 = vmatpush1.msra.mxu0 %v308
      %325 = vmatprep.subr.mxu0 0.0
      %326 = vmatpush1.msra.mxu0 0.0
      %327 = vmatprep.subr.mxu0 0.0
      %328 = vmatpush1.msra.mxu0 0.0
      %329 = vmatprep.subr.mxu0 0.0
      %330 = vmatpush1.msra.mxu0 0.0
      %331 = vmatprep.subr.mxu0 0.0
      %332 = vmatpush1.msra.mxu0 0.0
      %333 = vmatprep.subr.mxu0 0.0
      %334 = vmatpush1.msra.mxu0 0.0
      %335 = vmatprep.subr.mxu0 0.0
      %336 = vmatpush1.msra.mxu0 0.0
      %337 = vmatprep.subr.mxu0 0.0
      %338 = vmatpush1.msra.mxu0 0.0
      %339 = vmatprep.subr.mxu0 0.0
      %340 = vmatpush1.msra.mxu0 0.0
      %341 = vmatprep.subr.mxu0 0.0
      %342 = vmatpush1.msra.mxu0 0.0
      %343 = vmatprep.subr.mxu0 0.0
      %344 = vmatpush1.msra.mxu0 0.0
      %345 = vmatprep.subr.mxu0 0.0
      %346 = vmatpush1.msra.mxu0 0.0
      %347 = vmatprep.subr.mxu0 0.0
      %348 = vmatpush1.msra.mxu0 0.0
      %349 = vmatprep.subr.mxu0 0.0
      %350 = vmatpush1.msra.mxu0 0.0
      %351 = vmatprep.subr.mxu0 0.0
      %352 = vmatpush1.msra.mxu0 0.0
      %353 = vmatprep.subr.mxu0 0.0
      %354 = vmatpush1.msra.mxu0 0.0
      %355 = vmatprep.subr.mxu0 0.0
      %356 = vmatpush1.msra.mxu0 0.0
      %357 = vmatprep.subr.mxu0 0.0
      %358 = vmatpush1.msra.mxu0 0.0
      %359 = vmatprep.subr.mxu0 0.0
      %360 = vmatpush1.msra.mxu0 0.0
      %361 = vmatprep.subr.mxu0 0.0
      %362 = vmatpush1.msra.mxu0 0.0
      %363 = vmatprep.subr.mxu0 0.0
      %364 = vmatpush1.msra.mxu0 0.0
      %365 = vmatprep.subr.mxu0 0.0
      %366 = vmatpush1.msra.mxu0 0.0
      %367 = vmatprep.subr.mxu0 0.0
      %368 = vmatpush1.msra.mxu0 0.0
      %369 = vmatprep.subr.mxu0 0.0
      %370 = vmatpush1.msra.mxu0 0.0
      %371 = vmatprep.subr.mxu0 0.0
      %372 = vmatpush1.msra.mxu0 0.0
      %373 = vmatprep.subr.mxu0 0.0
      %374 = vmatpush1.msra.mxu0 0.0
      %375 = vmatprep.subr.mxu0 0.0
      %376 = vmatpush1.msra.mxu0 0.0
      %377 = vmatprep.subr.mxu0 0.0
      %378 = vmatpush1.msra.mxu0 0.0
      %379 = vmatprep.subr.mxu0 0.0
      %380 = vmatpush1.msra.mxu0 0.0
      %381 = vmatprep.mubr.f32.mxu0 0.0
      %382 = vmatmul.mubr.f32.gmra.mrb[0].mxu0 %v315
      %v383 = vpop.f32.mrb[0].mxu0
      %v384 = vadd.f32 %v313, %v383
      %v385 = vpop.f32.mrb[0].mxu0
      %386 = vdwg.mxu0
      %v387 = vtanh.pop %v384
      %v388 = vld [vmem:[%s1 + $0x50] sm:$0xff]
      %v389 = vld [vmem:[%s1 + $0x58] sm:$0xff]
      %v390 = vld [vmem:[%s1 + $0x60] sm:$0xff]
      %v391 = vld [vmem:[%s1 + $0x68] sm:$0xff]
      %v392 = vld [vmem:[%s1 + $0x73] sm:$0x1]
      %v393 = vlaneseq
      %v394 = vshrl.u32 %v393, 7
      %v395 = vsub.s32 0, %v394
      %v396 = vrot.slane %v392, %v395
      %v398 = vsel %vm230, %v387, 0
      %400 = vmatprep.subr.mxu0 0.0
      %401 = vmatpush1.msra.mxu0 %v388
      %402 = vmatprep.subr.mxu0 0.0
      %403 = vmatpush1.msra.mxu0 %v389
      %404 = vmatprep.subr.mxu0 0.0
      %405 = vmatpush1.msra.mxu0 %v390
      %406 = vmatprep.subr.mxu0 0.0
      %407 = vmatpush1.msra.mxu0 %v391
      %408 = vmatprep.subr.mxu0 0.0
      %409 = vmatpush1.msra.mxu0 0.0
      %410 = vmatprep.subr.mxu0 0.0
      %411 = vmatpush1.msra.mxu0 0.0
      %412 = vmatprep.subr.mxu0 0.0
      %413 = vmatpush1.msra.mxu0 0.0
      %414 = vmatprep.subr.mxu0 0.0
      %415 = vmatpush1.msra.mxu0 0.0
      %416 = vmatprep.subr.mxu0 0.0
      %417 = vmatpush1.msra.mxu0 0.0
      %418 = vmatprep.subr.mxu0 0.0
      %419 = vmatpush1.msra.mxu0 0.0
      %420 = vmatprep.subr.mxu0 0.0
      %421 = vmatpush1.msra.mxu0 0.0
      %422 = vmatprep.subr.mxu0 0.0
      %423 = vmatpush1.msra.mxu0 0.0
      %424 = vmatprep.subr.mxu0 0.0
      %425 = vmatpush1.msra.mxu0 0.0
      %426 = vmatprep.subr.mxu0 0.0
      %427 = vmatpush1.msra.mxu0 0.0
      %428 = vmatprep.subr.mxu0 0.0
      %429 = vmatpush1.msra.mxu0 0.0
      %430 = vmatprep.subr.mxu0 0.0
      %431 = vmatpush1.msra.mxu0 0.0
      %432 = vmatprep.subr.mxu0 0.0
      %433 = vmatpush1.msra.mxu0 0.0
      %434 = vmatprep.subr.mxu0 0.0
      %435 = vmatpush1.msra.mxu0 0.0
      %436 = vmatprep.subr.mxu0 0.0
      %437 = vmatpush1.msra.mxu0 0.0
      %438 = vmatprep.subr.mxu0 0.0
      %439 = vmatpush1.msra.mxu0 0.0
      %440 = vmatprep.subr.mxu0 0.0
      %441 = vmatpush1.msra.mxu0 0.0
      %442 = vmatprep.subr.mxu0 0.0
      %443 = vmatpush1.msra.mxu0 0.0
      %444 = vmatprep.subr.mxu0 0.0
      %445 = vmatpush1.msra.mxu0 0.0
      %446 = vmatprep.subr.mxu0 0.0
      %447 = vmatpush1.msra.mxu0 0.0
      %448 = vmatprep.subr.mxu0 0.0
      %449 = vmatpush1.msra.mxu0 0.0
      %450 = vmatprep.subr.mxu0 0.0
      %451 = vmatpush1.msra.mxu0 0.0
      %452 = vmatprep.subr.mxu0 0.0
      %453 = vmatpush1.msra.mxu0 0.0
      %454 = vmatprep.subr.mxu0 0.0
      %455 = vmatpush1.msra.mxu0 0.0
      %456 = vmatprep.subr.mxu0 0.0
      %457 = vmatpush1.msra.mxu0 0.0
      %458 = vmatprep.subr.mxu0 0.0
      %459 = vmatpush1.msra.mxu0 0.0
      %460 = vmatprep.subr.mxu0 0.0
      %461 = vmatpush1.msra.mxu0 0.0
      %462 = vmatprep.subr.mxu0 0.0
      %463 = vmatpush1.msra.mxu0 0.0
      %464 = vmatprep.mubr.f32.mxu0 0.0
      %465 = vmatmul.mubr.f32.gmra.mrb[0].mxu0 %v398
      %v466 = vpop.f32.mrb[0].mxu0
      %v467 = vadd.f32 %v396, %v466
      %v468 = vpop.f32.mrb[0].mxu0
      %469 = vdwg.mxu0
      %471 = vrot.lane.b32.xlu0 %v301, 96
      %v472 = vpop.permute.xlu0 %471
      %475 = vrot.lane.b32.xlu0 %v467, 8
      %v476 = vpop.permute.xlu0 %475
      %vm478 = vcmask 64512
      %v479 = vsel %vm478, %v472, %v476
      %vm480 = vcmask 195584
      %481 = vst.msk [vmem:[%s138] sm:$0xff] %vm480, %v479
      %p482 = scmp.lt.s32.totalorder %s13, 2
      %s483 = scalar_select %p482, %s13, 2
      %s484 = smul.addr %s483, 8
      %s485 = scalar_lea.vmem %s2, %s484
      // Predicated region
      $region29: #{network_forward.1} parent=27 // pred_check
        %p486 = pneg %p78
      $region30: #{network_forward.1} parent=27 // pred_check_branch
        %488 = sbr.rel (%p486) target = $region32
      $region31: #{network_forward.1} parent=27 // pred_region
        _
      $region32: #{network_forward.1} parent=27 // pred_fallthru
        _
    $region28: #{network_forward.1} parent=5 // pred_fallthru
      _
    %p489 = scmp.le.s32.totalorder 2, %s8
    // Predicated region
    $region33: #{network_forward.1} parent=5 // pred_check
      %p490 = pneg %p489
    $region34: #{network_forward.1} parent=5 // pred_check_branch
      %492 = sbr.rel (%p490) target = $region36
    $region35: #{network_forward.1} parent=5 // pred_region
      %s493 = ssub.s32 %s8, 2
      // Predicated region
      $region37: #{network_forward.1} parent=35 // pred_check
        %p494 = pneg %p84
      $region38: #{network_forward.1} parent=35 // pred_check_branch
        %496 = sbr.rel (%p494) target = $region40
      $region39: #{network_forward.1} parent=35 // pred_region
        %p497 = scmp.lt.s32.totalorder %s14, 2
        %s498 = scalar_select %p497, %s14, 2
        %s499 = smul.addr %s498, 8
        %s500 = scalar_lea.vmem %s2, %s499
      $region40: #{network_forward.1} parent=35 // pred_fallthru
        _
    $region36: #{network_forward.1} parent=5 // pred_fallthru
      _
  $region6: #{network_forward.1} parent=0 // loop_footer
    %s12 = sadd.s32 1, %s8
  $region7: #{network_forward.1} parent=0 // loop_footer_branch
    %7 = sbr.rel target = $region3
  $region8: #{network_forward.1} parent=0 // loop_exit
    _

</llo_original>
